<compile_context>
chip_gen: v7x
topology: tpu7x:2x2x1
jax: 0.10.0
libtpu: 0.0.40
codegen_flags: <defaults>
</compile_context>

<pallas_src>
import math

import jax
import jax.numpy as jnp
from jax.experimental import pallas as pl
from jax.experimental.pallas import tpu as pltpu


def prepare_cnn_observer_params(W1, b1, W2, b2, scan_window):
    """One-time parameter preparation (hoisted off the per-call hot path).

    W1: (H, Cin, K1) torch Conv1d weight layout, b1: (H,)
    W2: (Cout, H, K2), b2: (Cout,)

    Returns:
      T   : (S*Cin, K2*H), S = K2 + K1 - 1, banded/Toeplitz conv1 weight with
            T[s*Cin + i, t*H + j] = W1[j, i, s - t] for s - t in [0, K1), else 0.
            slab @ T produces the GELU input for ALL K2 conv1 rows of the last
            conv2 window, already flattened t-major (row = t*H + j).
      b1t : (1, K2*H)   b1 tiled K2 times (matches the t-major layout of h).
      w2r : (K2*H, Cout) rows ordered (t, h):  w2r[t*H + j, co] = W2[co, j, t].
      b2r : (1, Cout)
    """
    H, Cin, K1 = W1.shape
    Cout, H2, K2 = W2.shape
    assert H2 == H and K1 == scan_window and K2 == 2 * scan_window
    S = K2 + K1 - 1

    # (K1*Cin, H) with rows ordered (k, cin): w1r[k*Cin + i, j] = W1[j, i, k]
    w1r = jnp.transpose(W1, (2, 1, 0)).reshape(K1 * Cin, H).astype(jnp.float32)

    # Banded Toeplitz: block starting at row t*Cin, column t*H is w1r.
    T = jnp.zeros((S * Cin, K2 * H), jnp.float32)
    for t in range(K2):
        T = T.at[t * Cin:(t + K1) * Cin, t * H:(t + 1) * H].set(w1r)

    b1t = jnp.tile(b1.astype(jnp.float32), K2).reshape(1, K2 * H)
    w2r = jnp.transpose(W2, (2, 1, 0)).reshape(K2 * H, Cout).astype(jnp.float32)
    b2r = b2.reshape(1, Cout).astype(jnp.float32)
    return T, b1t, w2r, b2r


def cnn_observer_forward(u, T, b1t, w2r, b2r, scan_window):
    """u: (B, L, Cin) float32, params from prepare_cnn_observer_params.
    Returns (B, 1, Cout) float32 == tanh(last step of the CNN stack)."""
    B, L, Cin = u.shape
    assert scan_window >= 4, "stride = scan_window // 4 must be >= 1"
    K1 = scan_window
    K2 = 2 * scan_window
    stride = scan_window // 4
    pad = scan_window // 2
    S = K2 + K1 - 1
    H = b1t.shape[1] // K2
    Cout = w2r.shape[1]
    assert T.shape == (S * Cin, K2 * H) and w2r.shape[0] == K2 * H

    L_pad = L + 2 * pad
    L1 = L_pad - K1 + 1                      # conv1 output length
    L2 = (L1 - K2) // stride + 1             # conv2 output length
    assert L2 >= 1, "sequence too short for second conv"
    start = (L2 - 1) * stride                # first conv1 row of last conv2 window
    lo = start - pad                         # first *unpadded* input row touched
    r0 = max(lo, 0)                          # valid input row range [r0, r1)
    r1 = min(lo + S, L)
    dr = r0 - lo                             # destination row offset inside slab
    n = r1 - r0                              # number of valid rows
    touches_pad = (lo < 0) or (lo + S > L)

    inv_sqrt2 = 1.0 / math.sqrt(2.0)

    def kernel(x2d_ref, T_ref, b1t_ref, w2_ref, b2_ref, o_ref, slab_ref):
        # ---- input slab of the last conv2 window: (B, S*Cin) ----------------
        if touches_pad:
            slab_ref[...] = jnp.zeros_like(slab_ref)          # padded cols -> 0
            # ONE contiguous lane-range copy for the whole batch.
            slab_ref[:, dr * Cin:(dr + n) * Cin] = x2d_ref[:, r0 * Cin:r1 * Cin]
            slab = slab_ref[...]
        else:
            # No padding touched: feed the contiguous slice of u directly.
            slab = x2d_ref[:, lo * Cin:(lo + S) * Cin]

        # ---- conv1 + window-flatten fused: ONE matmul, then exact GELU ------
        h = jnp.dot(slab, T_ref[...],
                    preferred_element_type=jnp.float32) + b1t_ref[...]
        h = 0.5 * h * (1.0 + jax.lax.erf(h * inv_sqrt2))      # (B, K2*H)

        # ---- conv2 (last output position): ONE matmul, bias, tanh -----------
        y = jnp.dot(h, w2_ref[...],
                    preferred_element_type=jnp.float32) + b2_ref[...]
        o_ref[...] = jnp.tanh(y)                              # single store

    out = pl.pallas_call(
        kernel,
        out_shape=jax.ShapeDtypeStruct((B, Cout), jnp.float32),
        scratch_shapes=[
            pltpu.VMEM((B, S * Cin), jnp.float32),            # tiny input slab
        ],
    )(u.astype(jnp.float32).reshape(B, L * Cin), T, b1t, w2r, b2r)

    return out.reshape(B, 1, Cout)                            # free keepdim axis


def reference_forward(u, W1, b1, W2, b2, scan_window):
    """Pure-JAX reference mirroring the PyTorch module exactly."""
    x = jnp.transpose(u, (0, 2, 1))  # (B, C_in, L)
    y = jax.lax.conv_general_dilated(
        x, W1, window_strides=(1,),
        padding=[(scan_window // 2, scan_window // 2)],
        dimension_numbers=("NCH", "OIH", "NCH"))
    y = y + b1[None, :, None]
    y = 0.5 * y * (1.0 + jax.lax.erf(y / jnp.sqrt(2.0)))
    y = jax.lax.conv_general_dilated(
        y, W2, window_strides=(scan_window // 4,), padding=[(0, 0)],
        dimension_numbers=("NCH", "OIH", "NCH"))
    y = y + b2[None, :, None]
    y = jnp.transpose(y, (0, 2, 1))    # (B, L2, C_out)
    y = y[:, -1:, :]                   # last step, keepdim
    return jnp.tanh(y)


if __name__ == "__main__":
    # Module hyperparameters (small, consistent with the forward pass).
    in_features = 4
    out_features = 4
    hidden_channels = 8
    scan_window = 8        # padding=4, conv2 kernel=16, stride=2
    B, L = 2, 32

    key = jax.random.PRNGKey(0)
    k_u, k_w1, k_b1, k_w2, k_b2 = jax.random.split(key, 5)

    u = jax.random.normal(k_u, (B, L, in_features), jnp.float32)
    # Deterministic synthetic parameters (shapes match torch.nn.Conv1d weights).
    W1 = 0.1 * jax.random.normal(k_w1, (hidden_channels, in_features, scan_window), jnp.float32)
    b1 = 0.1 * jax.random.normal(k_b1, (hidden_channels,), jnp.float32)
    W2 = 0.1 * jax.random.normal(k_w2, (out_features, hidden_channels, scan_window * 2), jnp.float32)
    b2 = 0.1 * jax.random.normal(k_b2, (out_features,), jnp.float32)

    # One-time parameter prep (off the hot path).
    T, b1t, w2r, b2r = prepare_cnn_observer_params(W1, b1, W2, b2, scan_window)
    T, b1t, w2r, b2r = jax.block_until_ready((T, b1t, w2r, b2r))

    y = cnn_observer_forward(u, T, b1t, w2r, b2r, scan_window)
    y = jax.block_until_ready(y)

    y_ref = reference_forward(u, W1, b1, W2, b2, scan_window)
    assert y.shape == (B, 1, out_features), y.shape
    assert jnp.allclose(y, y_ref, atol=1e-4, rtol=1e-4), (y, y_ref)

    print("KERNEL_OK")
</pallas_src>

<mosaic_0001>
module attributes {stable_mosaic.version = 11 : i64} {
  func.func @kernel(%arg0: memref<2x128xf32, #tpu.memory_space<vmem>>, %arg1: memref<92x128xf32, #tpu.memory_space<vmem>>, %arg2: memref<1x128xf32, #tpu.memory_space<vmem>>, %arg3: memref<128x4xf32, #tpu.memory_space<vmem>>, %arg4: memref<1x4xf32, #tpu.memory_space<vmem>>, %arg5: memref<2x4xf32, #tpu.memory_space<vmem>>, %arg6: memref<2x92xf32, #tpu.memory_space<vmem>>) attributes {dimension_semantics = [], scalar_prefetch = 0 : i64, scratch_operands = 1 : i64, tpu.core_type = #tpu.core_type<tc>} {
    %cst = arith.constant 0.000000e+00 : f32
    %0 = vector.broadcast %cst : f32 to vector<2x92xf32>
    %c0 = arith.constant 0 : index
    %c0_0 = arith.constant 0 : index
    %1 = vector.load %arg6[%c0, %c0_0] : memref<2x92xf32, #tpu.memory_space<vmem>>, vector<2x92xf32>
    tpu.vector_store %arg6[%c0, %c0_0], %0 {strides = array<i32>} : memref<2x92xf32, #tpu.memory_space<vmem>>, vector<2x92xf32>,
    %c0_1 = arith.constant 0 : index
    %c48 = arith.constant 48 : index
    %2 = vector.load %arg0[%c0_1, %c48] : memref<2x128xf32, #tpu.memory_space<vmem>>, vector<2x80xf32>
    %c0_2 = arith.constant 0 : index
    %c0_3 = arith.constant 0 : index
    %3 = vector.load %arg6[%c0_2, %c0_3] : memref<2x92xf32, #tpu.memory_space<vmem>>, vector<2x80xf32>
    tpu.vector_store %arg6[%c0_2, %c0_3], %2 {strides = array<i32>} : memref<2x92xf32, #tpu.memory_space<vmem>>, vector<2x80xf32>,
    %c0_4 = arith.constant 0 : index
    %c0_5 = arith.constant 0 : index
    %4 = vector.load %arg6[%c0_4, %c0_5] : memref<2x92xf32, #tpu.memory_space<vmem>>, vector<2x92xf32>
    %c0_6 = arith.constant 0 : index
    %c0_7 = arith.constant 0 : index
    %5 = vector.load %arg1[%c0_6, %c0_7] : memref<92x128xf32, #tpu.memory_space<vmem>>, vector<92x128xf32>
    %cst_8 = arith.constant dense<0.000000e+00> : vector<2x128xf32>
    %6 = tpu.matmul %4, %5, %cst_8 {dimension_numbers = #tpu.dot_dimension_numbers<[1], [0], [0], [1], [0, 0, 1, 1], [], []>} : vector<2x92xf32>, vector<92x128xf32>, vector<2x128xf32> -> vector<2x128xf32>
    %c0_9 = arith.constant 0 : index
    %c0_10 = arith.constant 0 : index
    %7 = vector.load %arg2[%c0_9, %c0_10] : memref<1x128xf32, #tpu.memory_space<vmem>>, vector<1x128xf32>
    %8 = vector.broadcast %7 : vector<1x128xf32> to vector<2x128xf32>
    %9 = arith.addf %6, %8 : vector<2x128xf32>
    %cst_11 = arith.constant 5.000000e-01 : f32
    %10 = vector.broadcast %cst_11 : f32 to vector<2x128xf32>
    %11 = arith.mulf %10, %9 : vector<2x128xf32>
    %cst_12 = arith.constant 0.707106769 : f32
    %12 = vector.broadcast %cst_12 : f32 to vector<2x128xf32>
    %13 = arith.mulf %9, %12 : vector<2x128xf32>
    %14 = math.erf %13 : vector<2x128xf32>
    %cst_13 = arith.constant 1.000000e+00 : f32
    %15 = vector.broadcast %cst_13 : f32 to vector<2x128xf32>
    %16 = arith.addf %15, %14 : vector<2x128xf32>
    %17 = arith.mulf %11, %16 : vector<2x128xf32>
    %c0_14 = arith.constant 0 : index
    %c0_15 = arith.constant 0 : index
    %18 = vector.load %arg3[%c0_14, %c0_15] : memref<128x4xf32, #tpu.memory_space<vmem>>, vector<128x4xf32>
    %cst_16 = arith.constant dense<0.000000e+00> : vector<2x4xf32>
    %19 = tpu.matmul %17, %18, %cst_16 {dimension_numbers = #tpu.dot_dimension_numbers<[1], [0], [0], [1], [0, 0, 1, 1], [], []>} : vector<2x128xf32>, vector<128x4xf32>, vector<2x4xf32> -> vector<2x4xf32>
    %c0_17 = arith.constant 0 : index
    %c0_18 = arith.constant 0 : index
    %20 = vector.load %arg4[%c0_17, %c0_18] : memref<1x4xf32, #tpu.memory_space<vmem>>, vector<1x4xf32>
    %21 = vector.broadcast %20 : vector<1x4xf32> to vector<2x4xf32>
    %22 = arith.addf %19, %21 : vector<2x4xf32>
    %23 = math.tanh %22 : vector<2x4xf32>
    %c0_19 = arith.constant 0 : index
    %c0_20 = arith.constant 0 : index
    %24 = vector.load %arg5[%c0_19, %c0_20] : memref<2x4xf32, #tpu.memory_space<vmem>>, vector<2x4xf32>
    tpu.vector_store %arg5[%c0_19, %c0_20], %23 {strides = array<i32>} : memref<2x4xf32, #tpu.memory_space<vmem>>, vector<2x4xf32>,
    return
  }
}

</mosaic_0001>

<llo_original>
// kernel: tpu_custom_call.1
$region0: #{tpu_custom_call.1}
  #allocation0 [shape = 'u32[]', space=smem, size = 0x4, offset = 0x4, fixed_abs, tag = 'smem constant byte address 0x4 - core index']
  #allocation1 [shape = 'u32[144,128]{1,0:T(1,128)}', space=vmem, size = 0x12000, scoped, tag = 'internal scratch']
  #allocation2 [shape = 'f32[2,92]{1,0:T(2,128)}', space=vmem, size = 0x400, scoped, tag = 'scratch operand']
  %s0 = inlined_call_operand.vmem [shape: f32[2,128], index: 0, kind: input, shape index: {}]
  %s1 = inlined_call_operand.vmem [shape: f32[92,128], index: 1, kind: input, shape index: {}]
  %s2 = inlined_call_operand.vmem [shape: f32[1,128], index: 2, kind: input, shape index: {}]
  %s3 = inlined_call_operand.vmem [shape: f32[128,4], index: 3, kind: input, shape index: {}]
  %s4 = inlined_call_operand.vmem [shape: f32[1,4], index: 4, kind: input, shape index: {}]
  %s5 = inlined_call_operand.hbm [shape: f32[2,4], index: 5, kind: output, shape index: {}]
  %s6 = sld [smem:[#allocation0]]
  $region30: #{tpu_custom_call.1} parent=0
    _
  %s8 = ssub.s32 1, %s6
  %s9 = scalar_select 0, %s8, %s6
  $region1: #{tpu_custom_call.1} parent=0
    #allocation3 [shape = 'u8[1024]{0}', space=vmem, size = 0x400, scoped, tag = 'output window, operand 0, single buffered']
    #allocation4 [shape = 's32[1]{0}', space=sflag, size = 0x4, scoped, tag = 'scoped memory for tpu_custom_call.1']
    %10 = vsyncpa [#allocation4], 0
    // Predicated region
    $region2: #{tpu_custom_call.1} parent=1 // pred_check
      _
    $region3: #{tpu_custom_call.1} parent=1 // pred_check_branch
      %12 = sbr.rel (0) target = $region5
    $region4: #{tpu_custom_call.1} parent=1 // pred_region
      _
    $region5: #{tpu_custom_call.1} parent=1 // pred_fallthru
      _
    // Predicated region
    $region6: #{tpu_custom_call.1} parent=1 // pred_check
      _
    $region7: #{tpu_custom_call.1} parent=1 // pred_check_branch
      %14 = sbr.rel (0) target = $region9
    $region8: #{tpu_custom_call.1} parent=1 // pred_region
      _
    $region9: #{tpu_custom_call.1} parent=1 // pred_fallthru
      _
    // Predicated region
    $region10: #{tpu_custom_call.1} parent=1 // pred_check
      _
    $region11: #{tpu_custom_call.1} parent=1 // pred_check_branch
      %16 = sbr.rel (0) target = $region13
    $region12: #{tpu_custom_call.1} parent=1 // pred_region
      _
    $region13: #{tpu_custom_call.1} parent=1 // pred_fallthru
      _
    // Predicated region
    $region14: #{tpu_custom_call.1} parent=1 // pred_check
      _
    $region15: #{tpu_custom_call.1} parent=1 // pred_check_branch
      %18 = sbr.rel (0) target = $region17
    $region16: #{tpu_custom_call.1} parent=1 // pred_region
      _
    $region17: #{tpu_custom_call.1} parent=1 // pred_fallthru
      _
    // Predicated region
    $region18: #{tpu_custom_call.1} parent=1 // pred_check
      _
    $region19: #{tpu_custom_call.1} parent=1 // pred_check_branch
      %20 = sbr.rel (0) target = $region21
    $region20: #{tpu_custom_call.1} parent=1 // pred_region
      _
    $region21: #{tpu_custom_call.1} parent=1 // pred_fallthru
      _
    %vm21 = vcmask 746496
    %22 = vst.msk [vmem:[#allocation2] sm:$0x3] %vm21, 0.0
    %v23 = vld [vmem:[%s0] sm:$0x3]
    %25 = vrot.lane.b32.xlu0 %v23, 80
    %v26 = vpop.permute.xlu0 %25
    %vm28 = vcmask 648192
    %29 = vst.msk [vmem:[#allocation2] sm:$0x3] %vm28, %v26
    %v30 = vld [vmem:[#allocation2] sm:$0x3]
    %v31 = vld [vmem:[%s1] sm:$0xff]
    %v32 = vld [vmem:[%s1 + $0x8] sm:$0xff]
    %v33 = vld [vmem:[%s1 + $0x10] sm:$0xff]
    %v34 = vld [vmem:[%s1 + $0x18] sm:$0xff]
    %v35 = vld [vmem:[%s1 + $0x20] sm:$0xff]
    %v36 = vld [vmem:[%s1 + $0x28] sm:$0xff]
    %v37 = vld [vmem:[%s1 + $0x30] sm:$0xff]
    %v38 = vld [vmem:[%s1 + $0x38] sm:$0xff]
    %v39 = vld [vmem:[%s1 + $0x40] sm:$0xff]
    %v40 = vld [vmem:[%s1 + $0x48] sm:$0xff]
    %v41 = vld [vmem:[%s1 + $0x50] sm:$0xff]
    %v42 = vld [vmem:[%s1 + $0x58] sm:$0xf]
    %v43 = vld [vmem:[%s2] sm:$0x1]
    %v45 = vlaneseq
    %v46 = vshrl.u32 %v45, 7
    %v47 = vsub.s32 0, %v46
    %v48 = vrot.slane %v43, %v47
    %vm50 = vcmask 752640
    %v52 = vsel %vm50, %v30, 0
    %vm54 = vcmask 1043456
    %v56 = vsel %vm54, %v42, 0
    %58 = vmatprep.subr.mxu0 0.0
    %59 = vmatpush1.msra.mxu0 %v31
    %60 = vmatprep.subr.mxu0 0.0
    %61 = vmatpush1.msra.mxu0 %v32
    %62 = vmatprep.subr.mxu0 0.0
    %63 = vmatpush1.msra.mxu0 %v33
    %64 = vmatprep.subr.mxu0 0.0
    %65 = vmatpush1.msra.mxu0 %v34
    %66 = vmatprep.subr.mxu0 0.0
    %67 = vmatpush1.msra.mxu0 %v35
    %68 = vmatprep.subr.mxu0 0.0
    %69 = vmatpush1.msra.mxu0 %v36
    %70 = vmatprep.subr.mxu0 0.0
    %71 = vmatpush1.msra.mxu0 %v37
    %72 = vmatprep.subr.mxu0 0.0
    %73 = vmatpush1.msra.mxu0 %v38
    %74 = vmatprep.subr.mxu0 0.0
    %75 = vmatpush1.msra.mxu0 %v39
    %76 = vmatprep.subr.mxu0 0.0
    %77 = vmatpush1.msra.mxu0 %v40
    %78 = vmatprep.subr.mxu0 0.0
    %79 = vmatpush1.msra.mxu0 %v41
    %80 = vmatprep.subr.mxu0 0.0
    %81 = vmatpush1.msra.mxu0 %v56
    %82 = vmatprep.subr.mxu0 0.0
    %83 = vmatpush1.msra.mxu0 0.0
    %84 = vmatprep.subr.mxu0 0.0
    %85 = vmatpush1.msra.mxu0 0.0
    %86 = vmatprep.subr.mxu0 0.0
    %87 = vmatpush1.msra.mxu0 0.0
    %88 = vmatprep.subr.mxu0 0.0
    %89 = vmatpush1.msra.mxu0 0.0
    %90 = vmatprep.subr.mxu0 0.0
    %91 = vmatpush1.msra.mxu0 0.0
    %92 = vmatprep.subr.mxu0 0.0
    %93 = vmatpush1.msra.mxu0 0.0
    %94 = vmatprep.subr.mxu0 0.0
    %95 = vmatpush1.msra.mxu0 0.0
    %96 = vmatprep.subr.mxu0 0.0
    %97 = vmatpush1.msra.mxu0 0.0
    %98 = vmatprep.subr.mxu0 0.0
    %99 = vmatpush1.msra.mxu0 0.0
    %100 = vmatprep.subr.mxu0 0.0
    %101 = vmatpush1.msra.mxu0 0.0
    %102 = vmatprep.subr.mxu0 0.0
    %103 = vmatpush1.msra.mxu0 0.0
    %104 = vmatprep.subr.mxu0 0.0
    %105 = vmatpush1.msra.mxu0 0.0
    %106 = vmatprep.subr.mxu0 0.0
    %107 = vmatpush1.msra.mxu0 0.0
    %108 = vmatprep.subr.mxu0 0.0
    %109 = vmatpush1.msra.mxu0 0.0
    %110 = vmatprep.subr.mxu0 0.0
    %111 = vmatpush1.msra.mxu0 0.0
    %112 = vmatprep.subr.mxu0 0.0
    %113 = vmatpush1.msra.mxu0 0.0
    %114 = vmatprep.subr.mxu0 0.0
    %115 = vmatpush1.msra.mxu0 0.0
    %116 = vmatprep.subr.mxu0 0.0
    %117 = vmatpush1.msra.mxu0 0.0
    %118 = vmatprep.subr.mxu0 0.0
    %119 = vmatpush1.msra.mxu0 0.0
    %120 = vmatprep.subr.mxu0 0.0
    %121 = vmatpush1.msra.mxu0 0.0
    %122 = vmatprep.mubr.f32.mxu0 0.0
    %123 = vmatmul.mubr.f32.gmra.mrb[0].mxu0 %v52
    %v124 = vpop.f32.mrb[0].mxu0
    %v125 = vadd.f32 %v48, %v124
    %v126 = vpop.f32.mrb[0].mxu0
    %127 = vdwg.mxu0
    %v128 = vmul.f32 %v125, 0.5
    %v129 = vmul.f32 %v125, 0.70710677
    %v130 = verf.f32.pop %v129
    %v131 = vadd.f32 %v130, 1.0
    %v132 = vmul.f32 %v128, %v131
    %v133 = vld [vmem:[%s3] sm:$0xff]
    %v134 = vld [vmem:[%s3 + $0x8] sm:$0xff]
    %v135 = vld [vmem:[%s3 + $0x10] sm:$0xff]
    %v136 = vld [vmem:[%s3 + $0x18] sm:$0xff]
    %v137 = vld [vmem:[%s3 + $0x20] sm:$0xff]
    %v138 = vld [vmem:[%s3 + $0x28] sm:$0xff]
    %v139 = vld [vmem:[%s3 + $0x30] sm:$0xff]
    %v140 = vld [vmem:[%s3 + $0x38] sm:$0xff]
    %v141 = vld [vmem:[%s3 + $0x40] sm:$0xff]
    %v142 = vld [vmem:[%s3 + $0x48] sm:$0xff]
    %v143 = vld [vmem:[%s3 + $0x50] sm:$0xff]
    %v144 = vld [vmem:[%s3 + $0x58] sm:$0xff]
    %v145 = vld [vmem:[%s3 + $0x60] sm:$0xff]
    %v146 = vld [vmem:[%s3 + $0x68] sm:$0xff]
    %v147 = vld [vmem:[%s3 + $0x70] sm:$0xff]
    %v148 = vld [vmem:[%s3 + $0x78] sm:$0xff]
    %v149 = vld [vmem:[%s4] sm:$0x1]
    %v151 = vlaneseq
    %v152 = vshrl.u32 %v151, 7
    %v153 = vsub.s32 0, %v152
    %v154 = vrot.slane %v149, %v153
    %156 = vmatprep.subr.mxu0 0.0
    %157 = vmatpush1.msra.mxu0 %v133
    %158 = vmatprep.subr.mxu0 0.0
    %159 = vmatpush1.msra.mxu0 %v134
    %160 = vmatprep.subr.mxu0 0.0
    %161 = vmatpush1.msra.mxu0 %v135
    %162 = vmatprep.subr.mxu0 0.0
    %163 = vmatpush1.msra.mxu0 %v136
    %164 = vmatprep.subr.mxu0 0.0
    %165 = vmatpush1.msra.mxu0 %v137
    %166 = vmatprep.subr.mxu0 0.0
    %167 = vmatpush1.msra.mxu0 %v138
    %168 = vmatprep.subr.mxu0 0.0
    %169 = vmatpush1.msra.mxu0 %v139
    %170 = vmatprep.subr.mxu0 0.0
    %171 = vmatpush1.msra.mxu0 %v140
    %172 = vmatprep.subr.mxu0 0.0
    %173 = vmatpush1.msra.mxu0 %v141
    %174 = vmatprep.subr.mxu0 0.0
    %175 = vmatpush1.msra.mxu0 %v142
    %176 = vmatprep.subr.mxu0 0.0
    %177 = vmatpush1.msra.mxu0 %v143
    %178 = vmatprep.subr.mxu0 0.0
    %179 = vmatpush1.msra.mxu0 %v144
    %180 = vmatprep.subr.mxu0 0.0
    %181 = vmatpush1.msra.mxu0 %v145
    %182 = vmatprep.subr.mxu0 0.0
    %183 = vmatpush1.msra.mxu0 %v146
    %184 = vmatprep.subr.mxu0 0.0
    %185 = vmatpush1.msra.mxu0 %v147
    %186 = vmatprep.subr.mxu0 0.0
    %187 = vmatpush1.msra.mxu0 %v148
    %188 = vmatprep.subr.mxu0 0.0
    %189 = vmatpush1.msra.mxu0 0.0
    %190 = vmatprep.subr.mxu0 0.0
    %191 = vmatpush1.msra.mxu0 0.0
    %192 = vmatprep.subr.mxu0 0.0
    %193 = vmatpush1.msra.mxu0 0.0
    %194 = vmatprep.subr.mxu0 0.0
    %195 = vmatpush1.msra.mxu0 0.0
    %196 = vmatprep.subr.mxu0 0.0
    %197 = vmatpush1.msra.mxu0 0.0
    %198 = vmatprep.subr.mxu0 0.0
    %199 = vmatpush1.msra.mxu0 0.0
    %200 = vmatprep.subr.mxu0 0.0
    %201 = vmatpush1.msra.mxu0 0.0
    %202 = vmatprep.subr.mxu0 0.0
    %203 = vmatpush1.msra.mxu0 0.0
    %204 = vmatprep.subr.mxu0 0.0
    %205 = vmatpush1.msra.mxu0 0.0
    %206 = vmatprep.subr.mxu0 0.0
    %207 = vmatpush1.msra.mxu0 0.0
    %208 = vmatprep.subr.mxu0 0.0
    %209 = vmatpush1.msra.mxu0 0.0
    %210 = vmatprep.subr.mxu0 0.0
    %211 = vmatpush1.msra.mxu0 0.0
    %212 = vmatprep.subr.mxu0 0.0
    %213 = vmatpush1.msra.mxu0 0.0
    %214 = vmatprep.subr.mxu0 0.0
    %215 = vmatpush1.msra.mxu0 0.0
    %216 = vmatprep.subr.mxu0 0.0
    %217 = vmatpush1.msra.mxu0 0.0
    %218 = vmatprep.subr.mxu0 0.0
    %219 = vmatpush1.msra.mxu0 0.0
    %220 = vmatprep.mubr.f32.mxu0 0.0
    %221 = vmatmul.mubr.f32.gmra.mrb[0].mxu0 %v132
    %v222 = vpop.f32.mrb[0].mxu0
    %v223 = vadd.f32 %v154, %v222
    %v224 = vpop.f32.mrb[0].mxu0
    %225 = vdwg.mxu0
    %v226 = vtanh.pop %v223
    %vm227 = vcmask 25600
    %228 = vst.msk [vmem:[#allocation3] sm:$0x3] %vm227, %v226
    // Predicated region
    $region22: #{tpu_custom_call.1} parent=1 // pred_check
      _
    $region23: #{tpu_custom_call.1} parent=1 // pred_check_branch
      %230 = sbr.rel (0) target = $region25
    $region24: #{tpu_custom_call.1} parent=1 // pred_region
      %s232 = ssub.s32 32, 32
      %233 = vsyncadd [#allocation4], %s232
      %s235 = sshll.u32 [#allocation3], 4
      %s236 = int_to_ptr.vmem [resolvable:$true] %s235
      %238 = dma.vmem_to_hbm [thread:$0]  %s236, 32, %s5, [#allocation4]
    $region25: #{tpu_custom_call.1} parent=1 // pred_fallthru
      _
    // Predicated region
    $region26: #{tpu_custom_call.1} parent=1 // pred_check
      _
    $region27: #{tpu_custom_call.1} parent=1 // pred_check_branch
      %240 = sbr.rel (0) target = $region29
    $region28: #{tpu_custom_call.1} parent=1 // pred_region
      %241 = dma.done [#allocation4], 32
    $region29: #{tpu_custom_call.1} parent=1 // pred_fallthru
      _
    %242 = vsyncpa [#allocation4], 1

</llo_original>
